<compile_context>
chip_gen: v6e
topology: v6e:2x2x1
jax: 0.10.0
libtpu: 0.0.40
codegen_flags: <defaults>
</compile_context>

<pallas_src>
import functools
import math

import jax
import jax.numpy as jnp
from jax.experimental import pallas as pl
from jax.experimental.pallas import tpu as pltpu

_LOG_2PI = math.log(2.0 * math.pi)
_LANES = 128


def _softplus(x):
    # numerically stable softplus, elementwise (VPU + EUP)
    return jnp.maximum(x, 0.0) + jnp.log1p(jnp.exp(-jnp.abs(x)))


def _round_up(x, m):
    return ((x + m - 1) // m) * m


def cnp_actor_kernel(data_ref, w_ref, b_ref, out_ref, *,
                     n_batch, n_ctx, n_tgt, bn_pad, bt_pad,
                     act_dim, enc_dim, mask_lane):
    f32, bf16 = jnp.float32, jnp.bfloat16
    A = act_dim
    L = _LANES

    def w(i):          # (128,128) bf16 weight block i (static view, zero cost)
        return w_ref[i * L:(i + 1) * L, :]

    def b(i):          # (1,128) f32 bias row i
        return b_ref[i:i + 1, :]

    # ------------------------------ encoder MLP -------------------------------
    x = data_ref[0:bn_pad, :]                                           # (BNp,128) obs (+mask lane)
    h = jnp.tanh(jnp.dot(x.astype(bf16), w(0), preferred_element_type=f32) + b(0))
    h = jnp.tanh(jnp.dot(h.astype(bf16), w(1), preferred_element_type=f32) + b(1))
    r = jnp.dot(h.astype(bf16), w(2), preferred_element_type=f32) + b(2)  # (BNp,128); lanes>=E are 0

    # --------------------- masked mean over the context axis ------------------
    mask_col = x[:, mask_lane:mask_lane + 1]                            # (BNp,1) 0/1 mask
    lane_r = jax.lax.broadcasted_iota(jnp.int32, r.shape, 1)
    r1 = jnp.where(lane_r == enc_dim, 1.0, r)      # count rides along spare (zero) lane E
    rm = r1 * mask_col                                                  # VPU mask-multiply

    row_b = jax.lax.broadcasted_iota(jnp.int32, (n_batch, bn_pad), 0)
    col_j = jax.lax.broadcasted_iota(jnp.int32, (n_batch, bn_pad), 1)
    lo = row_b * n_ctx
    blk = ((col_j >= lo) & (col_j < lo + n_ctx)).astype(f32)            # (B,BNp) block-diag 0/1
    r_sum = jnp.dot(blk, rm, preferred_element_type=f32)                # (B,128); lane E = count
    cnt = r_sum[:, enc_dim:enc_dim + 1]                                 # (B,1)
    # guard: a fully-masked batch would be inf/NaN in the reference; clamp instead
    inv_cnt = pl.reciprocal(jnp.maximum(cnt, 1e-6), approx=True)
    r_agg = r_sum * inv_cnt                                             # (B,128) masked mean

    # ------------------------------ decoder MLP -------------------------------
    # first decoder layer split: q @ dw0 = r_agg @ dw0_r + target @ dw0_t (+ db0)
    bias_r = jnp.dot(r_agg.astype(bf16), w(3), preferred_element_type=f32) + b(3)   # (B,128)
    row_i = jax.lax.broadcasted_iota(jnp.int32, (bt_pad, n_batch), 0)
    col_b = jax.lax.broadcasted_iota(jnp.int32, (bt_pad, n_batch), 1)
    lo_t = col_b * n_tgt
    sel = ((row_i >= lo_t) & (row_i < lo_t + n_tgt)).astype(f32)        # (BTp,B) one-hot
    bias_rep = jnp.dot(sel, bias_r, preferred_element_type=f32)         # (BTp,128)

    t = data_ref[bn_pad:bn_pad + bt_pad, :]                             # (BTp,128) targets
    g = jnp.tanh(jnp.dot(t.astype(bf16), w(4), preferred_element_type=f32) + bias_rep)
    g = jnp.tanh(jnp.dot(g.astype(bf16), w(5), preferred_element_type=f32) + b(4))
    out = jnp.dot(g.astype(bf16), w(6), preferred_element_type=f32) + b(5)  # (BTp,128)
    # lanes [0,A) = mean, [A,2A) = raw std, rest 0 (dw2/db2 zero-padded in the wrapper)

    # ------------------ Normal(mean, std) log-prob (all f32) ------------------
    truth = data_ref[bn_pad + bt_pad:bn_pad + 2 * bt_pad, 0:A]          # (BTp,A)
    sp = _softplus(out)                                                 # softplus in place, 128 lanes
    mean = out[:, 0:A]
    std = sp[:, A:2 * A]
    inv_std = 1.0 / std                                                 # exact: feeds PPO ratio
    z = (truth - mean) * inv_std
    logp = -0.5 * (z * z) + jnp.log(inv_std) - 0.5 * _LOG_2PI
    logp_sum = jnp.sum(logp, axis=-1, keepdims=True)                    # (BTp,1)

    # ---------- packed lane-dense output: [mean | std | logp | 0...] ----------
    lane = jax.lax.broadcasted_iota(jnp.int32, (bt_pad, L), 1)
    out_ref[...] = jnp.where(lane < A, out,
                   jnp.where(lane < 2 * A, sp,
                   jnp.where(lane == 2 * A, logp_sum, 0.0)))


def cnp_actor_forward(observation, observation_mask, target, target_truth, params):
    """observation: (B, n_ctx, obs_dim+act_dim); observation_mask: (B, n_ctx, 1);
       target: (B, n_tgt, obs_dim); target_truth: (B, n_tgt, act_dim)."""
    B, n_ctx, d_in = observation.shape
    _, n_tgt, d_obs = target.shape
    act_dim = target_truth.shape[-1]
    (ew0, eb0, ew1, eb1, ew2, eb2, dw0, db0, dw1, db1, dw2, db2) = params
    enc = ew2.shape[-1]
    f32 = jnp.float32
    L = _LANES

    assert d_in <= L - 2, "obs_dim+act_dim must leave a spare lane for the mask"
    assert d_obs <= L and enc <= L - 1 and 2 * act_dim + 1 <= L
    assert dw0.shape[0] == enc + d_obs

    BN, BT = B * n_ctx, B * n_tgt
    bn_pad, bt_pad = _round_up(BN, 8), _round_up(BT, 8)
    mask_lane = L - 1

    # ----------------- data slab: [obs(+mask) | target | truth], f32 -----------------
    data = jnp.zeros((bn_pad + 2 * bt_pad, L), f32)
    data = data.at[:BN, :d_in].set(observation.reshape(BN, d_in).astype(f32))
    data = data.at[:BN, mask_lane].set(observation_mask.reshape(BN).astype(f32))
    data = data.at[bn_pad:bn_pad + BT, :d_obs].set(target.reshape(BT, d_obs).astype(f32))
    data = data.at[bn_pad + bt_pad:bn_pad + bt_pad + BT, :act_dim].set(
        target_truth.reshape(BT, act_dim).astype(f32))

    # ------------- weight slab: seven zero-padded (128,128) blocks, bf16 -------------
    def pad_w(wm):
        return jnp.zeros((L, L), f32).at[:wm.shape[0], :wm.shape[1]].set(wm.astype(f32))

    w_slab = jnp.concatenate(
        [pad_w(ew0), pad_w(ew1), pad_w(ew2),
         pad_w(dw0[:enc, :]), pad_w(dw0[enc:, :]), pad_w(dw1), pad_w(dw2)],
        axis=0).astype(jnp.bfloat16)                                     # (7*128, 128)

    # --------------------------- bias slab: (8,128) f32 ------------------------------
    def pad_b(bv):
        bv = bv.reshape(1, -1).astype(f32)
        return jnp.zeros((1, L), f32).at[:, :bv.shape[1]].set(bv)

    b_slab = jnp.concatenate(
        [pad_b(eb0), pad_b(eb1), pad_b(eb2), pad_b(db0), pad_b(db1), pad_b(db2),
         jnp.zeros((2, L), f32)], axis=0)                                # (8,128)

    kernel = functools.partial(
        cnp_actor_kernel, n_batch=B, n_ctx=n_ctx, n_tgt=n_tgt,
        bn_pad=bn_pad, bt_pad=bt_pad, act_dim=act_dim, enc_dim=enc,
        mask_lane=mask_lane)

    mm_rows = 3 * bn_pad + B + 3 * bt_pad          # rows through (·,128)x(128,128) matmuls
    cost = pl.CostEstimate(
        flops=int(2 * mm_rows * L * L + 2 * B * bn_pad * L + 2 * bt_pad * B * L),
        transcendentals=int((2 * bn_pad + 3 * bt_pad) * L),
        bytes_accessed=int(data.size * 4 + w_slab.size * 2 + b_slab.size * 4
                           + bt_pad * L * 4))

    vmem = pl.BlockSpec(memory_space=pltpu.MemorySpace.VMEM)
    packed = pl.pallas_call(
        kernel,
        out_shape=jax.ShapeDtypeStruct((bt_pad, L), f32),
        in_specs=[vmem, vmem, vmem],
        out_specs=vmem,
        compiler_params=pltpu.CompilerParams(vmem_limit_bytes=32 * 1024 * 1024),
        cost_estimate=cost,
    )(data, w_slab, b_slab)

    mean = packed[:BT, :act_dim].reshape(B, n_tgt, act_dim)
    std = packed[:BT, act_dim:2 * act_dim].reshape(B, n_tgt, act_dim)
    logp = packed[:BT, 2 * act_dim:2 * act_dim + 1].reshape(B, n_tgt, 1)
    return mean, std, logp


# ------------------------------ reference (pure JAX) ------------------------------
def reference_forward(observation, observation_mask, target, target_truth, params,
                      matmul_dtype=jnp.float32):
    (ew0, eb0, ew1, eb1, ew2, eb2, dw0, db0, dw1, db1, dw2, db2) = params
    act_dim = target_truth.shape[-1]

    def mm(a, wm):
        return jnp.dot(a.astype(matmul_dtype), wm.astype(matmul_dtype),
                       preferred_element_type=jnp.float32)

    h = jnp.tanh(mm(observation, ew0) + eb0)
    h = jnp.tanh(mm(h, ew1) + eb1)
    r = mm(h, ew2) + eb2
    m = observation_mask
    r_agg = (r * m).sum(axis=1) / m.sum(axis=1)                         # (B, enc)
    r_rep = jnp.broadcast_to(r_agg[:, None, :],
                             (target.shape[0], target.shape[1], r_agg.shape[-1]))
    q = jnp.concatenate([r_rep, target], axis=-1)
    g = jnp.tanh(mm(q, dw0) + db0)
    g = jnp.tanh(mm(g, dw1) + db1)
    out = mm(g, dw2) + db2
    mean = out[..., :act_dim]
    std = _softplus(out[..., act_dim:])
    logp = (-((target_truth - mean) ** 2) / (2.0 * std * std)
            - jnp.log(std) - 0.5 * _LOG_2PI)
    return mean, std, logp.sum(axis=-1, keepdims=True)


def init_mlp(key, sizes):
    params = []
    for m, n in zip(sizes[:-1], sizes[1:]):
        key, k1, k2 = jax.random.split(key, 3)
        params.append(jax.random.normal(k1, (m, n), jnp.float32) / jnp.sqrt(m))
        params.append(jax.random.normal(k2, (1, n), jnp.float32) * 0.01)
    return key, params


if __name__ == "__main__":
    obs_dim, act_dim = 6, 3
    hidden = 32
    enc_out = 16
    B, n_ctx, n_tgt = 2, 10, 5

    key = jax.random.PRNGKey(0)
    key, enc_params = init_mlp(key, [obs_dim + act_dim, hidden, hidden, enc_out])
    key, dec_params = init_mlp(key, [enc_out + obs_dim, hidden, hidden, 2 * act_dim])
    params = enc_params + dec_params

    key, k1, k2, k3 = jax.random.split(key, 4)
    observation = jax.random.normal(k1, (B, n_ctx, obs_dim + act_dim), jnp.float32)
    target = jax.random.normal(k2, (B, n_tgt, obs_dim), jnp.float32)
    target_truth = jax.random.normal(k3, (B, n_tgt, act_dim), jnp.float32)
    # mask out the last two context points of batch 1
    observation_mask = jnp.ones((B, n_ctx, 1), jnp.float32)
    observation_mask = observation_mask.at[1, -2:, 0].set(0.0)

    fwd = jax.jit(cnp_actor_forward)
    mean, std, logp = fwd(observation, observation_mask, target, target_truth, params)
    jax.block_until_ready((mean, std, logp))

    # tight check vs a reference using the same bf16-operand / f32-accumulate matmuls
    mean_b, std_b, logp_b = reference_forward(observation, observation_mask, target,
                                              target_truth, params,
                                              matmul_dtype=jnp.bfloat16)
    assert jnp.allclose(mean, mean_b, rtol=1e-2, atol=1e-2)
    assert jnp.allclose(std, std_b, rtol=1e-2, atol=1e-2)
    assert jnp.allclose(logp, logp_b, rtol=2e-2, atol=5e-2)

    # looser check vs full-f32 semantics of the original module (bf16 matmul tolerance)
    mean_f, std_f, logp_f = reference_forward(observation, observation_mask, target,
                                              target_truth, params,
                                              matmul_dtype=jnp.float32)
    assert jnp.allclose(mean, mean_f, rtol=5e-2, atol=5e-2)
    assert jnp.allclose(std, std_f, rtol=5e-2, atol=5e-2)
    assert jnp.allclose(logp, logp_f, rtol=1e-1, atol=1e-1)

    print("KERNEL_OK")
</pallas_src>

<mosaic_0001>
module attributes {stable_mosaic.version = 11 : i64} {
  func.func @cnp_actor_kernel(%arg0: memref<56x128xf32, #tpu.memory_space<vmem>>, %arg1: memref<896x128xbf16, #tpu.memory_space<vmem>>, %arg2: memref<8x128xf32, #tpu.memory_space<vmem>>, %arg3: memref<16x128xf32, #tpu.memory_space<vmem>>) attributes {dimension_semantics = [], scalar_prefetch = 0 : i64, scratch_operands = 0 : i64, tpu.core_type = #tpu.core_type<tc>} {
    %c0 = arith.constant 0 : index
    %c0_0 = arith.constant 0 : index
    %0 = vector.load %arg0[%c0, %c0_0] : memref<56x128xf32, #tpu.memory_space<vmem>>, vector<24x128xf32>
    %1 = arith.truncf %0 : vector<24x128xf32> to vector<24x128xbf16>
    %c0_1 = arith.constant 0 : index
    %c0_2 = arith.constant 0 : index
    %2 = vector.load %arg1[%c0_1, %c0_2] : memref<896x128xbf16, #tpu.memory_space<vmem>>, vector<128x128xbf16>
    %cst = arith.constant dense<0.000000e+00> : vector<24x128xf32>
    %3 = tpu.matmul %1, %2, %cst {dimension_numbers = #tpu.dot_dimension_numbers<[1], [0], [0], [1], [0, 0, 1, 1], [], []>} : vector<24x128xbf16>, vector<128x128xbf16>, vector<24x128xf32> -> vector<24x128xf32>
    %c0_3 = arith.constant 0 : index
    %c0_4 = arith.constant 0 : index
    %4 = vector.load %arg2[%c0_3, %c0_4] : memref<8x128xf32, #tpu.memory_space<vmem>>, vector<1x128xf32>
    %5 = vector.broadcast %4 : vector<1x128xf32> to vector<24x128xf32>
    %6 = arith.addf %3, %5 : vector<24x128xf32>
    %7 = math.tanh %6 : vector<24x128xf32>
    %8 = arith.truncf %7 : vector<24x128xf32> to vector<24x128xbf16>
    %c128 = arith.constant 128 : index
    %c0_5 = arith.constant 0 : index
    %9 = vector.load %arg1[%c128, %c0_5] : memref<896x128xbf16, #tpu.memory_space<vmem>>, vector<128x128xbf16>
    %cst_6 = arith.constant dense<0.000000e+00> : vector<24x128xf32>
    %10 = tpu.matmul %8, %9, %cst_6 {dimension_numbers = #tpu.dot_dimension_numbers<[1], [0], [0], [1], [0, 0, 1, 1], [], []>} : vector<24x128xbf16>, vector<128x128xbf16>, vector<24x128xf32> -> vector<24x128xf32>
    %c1 = arith.constant 1 : index
    %c0_7 = arith.constant 0 : index
    %11 = vector.load %arg2[%c1, %c0_7] : memref<8x128xf32, #tpu.memory_space<vmem>>, vector<1x128xf32>
    %12 = vector.broadcast %11 : vector<1x128xf32> to vector<24x128xf32>
    %13 = arith.addf %10, %12 : vector<24x128xf32>
    %14 = math.tanh %13 : vector<24x128xf32>
    %15 = arith.truncf %14 : vector<24x128xf32> to vector<24x128xbf16>
    %c256 = arith.constant 256 : index
    %c0_8 = arith.constant 0 : index
    %16 = vector.load %arg1[%c256, %c0_8] : memref<896x128xbf16, #tpu.memory_space<vmem>>, vector<128x128xbf16>
    %cst_9 = arith.constant dense<0.000000e+00> : vector<24x128xf32>
    %17 = tpu.matmul %15, %16, %cst_9 {dimension_numbers = #tpu.dot_dimension_numbers<[1], [0], [0], [1], [0, 0, 1, 1], [], []>} : vector<24x128xbf16>, vector<128x128xbf16>, vector<24x128xf32> -> vector<24x128xf32>
    %c2 = arith.constant 2 : index
    %c0_10 = arith.constant 0 : index
    %18 = vector.load %arg2[%c2, %c0_10] : memref<8x128xf32, #tpu.memory_space<vmem>>, vector<1x128xf32>
    %19 = vector.broadcast %18 : vector<1x128xf32> to vector<24x128xf32>
    %20 = arith.addf %17, %19 : vector<24x128xf32>
    %21 = vector.extract_strided_slice %0 {offsets = [0, 127], sizes = [24, 1], strides = [1, 1]} : vector<24x128xf32> to vector<24x1xf32>
    %22 = tpu.iota {dimensions = array<i32: 1>} : vector<24x128xi32>
    %c16_i32 = arith.constant 16 : i32
    %23 = vector.broadcast %c16_i32 : i32 to vector<24x128xi32>
    %24 = arith.cmpi eq, %22, %23 : vector<24x128xi32>
    %cst_11 = arith.constant 1.000000e+00 : f32
    %25 = vector.broadcast %cst_11 : f32 to vector<24x128xf32>
    %26 = arith.select %24, %25, %20 : vector<24x128xi1>, vector<24x128xf32>
    %27 = vector.broadcast %21 : vector<24x1xf32> to vector<24x128xf32>
    %28 = arith.mulf %26, %27 : vector<24x128xf32>
    %29 = tpu.iota {dimensions = array<i32: 0>} : vector<2x24xi32>
    %30 = tpu.iota {dimensions = array<i32: 1>} : vector<2x24xi32>
    %c10_i32 = arith.constant 10 : i32
    %31 = vector.broadcast %c10_i32 : i32 to vector<2x24xi32>
    %32 = arith.muli %29, %31 : vector<2x24xi32>
    %33 = arith.cmpi sge, %30, %32 : vector<2x24xi32>
    %c10_i32_12 = arith.constant 10 : i32
    %34 = vector.broadcast %c10_i32_12 : i32 to vector<2x24xi32>
    %35 = arith.addi %32, %34 : vector<2x24xi32>
    %36 = arith.cmpi slt, %30, %35 : vector<2x24xi32>
    %37 = arith.andi %33, %36 : vector<2x24xi1>
    %38 = arith.extui %37 : vector<2x24xi1> to vector<2x24xi32>
    %39 = arith.sitofp %38 : vector<2x24xi32> to vector<2x24xf32>
    %cst_13 = arith.constant dense<0.000000e+00> : vector<2x128xf32>
    %40 = tpu.matmul %39, %28, %cst_13 {dimension_numbers = #tpu.dot_dimension_numbers<[1], [0], [0], [1], [0, 0, 1, 1], [], []>} : vector<2x24xf32>, vector<24x128xf32>, vector<2x128xf32> -> vector<2x128xf32>
    %41 = vector.extract_strided_slice %40 {offsets = [0, 16], sizes = [2, 1], strides = [1, 1]} : vector<2x128xf32> to vector<2x1xf32>
    %cst_14 = arith.constant 9.99999997E-7 : f32
    %42 = vector.broadcast %cst_14 : f32 to vector<2x1xf32>
    %43 = arith.maximumf %41, %42 : vector<2x1xf32>
    %44 = tpu.reciprocal %43 {approx = true} : vector<2x1xf32> -> vector<2x1xf32>
    %45 = vector.broadcast %44 : vector<2x1xf32> to vector<2x128xf32>
    %46 = arith.mulf %40, %45 : vector<2x128xf32>
    %47 = arith.truncf %46 : vector<2x128xf32> to vector<2x128xbf16>
    %c384 = arith.constant 384 : index
    %c0_15 = arith.constant 0 : index
    %48 = vector.load %arg1[%c384, %c0_15] : memref<896x128xbf16, #tpu.memory_space<vmem>>, vector<128x128xbf16>
    %cst_16 = arith.constant dense<0.000000e+00> : vector<2x128xf32>
    %49 = tpu.matmul %47, %48, %cst_16 {dimension_numbers = #tpu.dot_dimension_numbers<[1], [0], [0], [1], [0, 0, 1, 1], [], []>} : vector<2x128xbf16>, vector<128x128xbf16>, vector<2x128xf32> -> vector<2x128xf32>
    %c3 = arith.constant 3 : index
    %c0_17 = arith.constant 0 : index
    %50 = vector.load %arg2[%c3, %c0_17] : memref<8x128xf32, #tpu.memory_space<vmem>>, vector<1x128xf32>
    %51 = vector.broadcast %50 : vector<1x128xf32> to vector<2x128xf32>
    %52 = arith.addf %49, %51 : vector<2x128xf32>
    %53 = tpu.iota {dimensions = array<i32: 0>} : vector<16x2xi32>
    %54 = tpu.iota {dimensions = array<i32: 1>} : vector<16x2xi32>
    %c5_i32 = arith.constant 5 : i32
    %55 = vector.broadcast %c5_i32 : i32 to vector<16x2xi32>
    %56 = arith.muli %54, %55 : vector<16x2xi32>
    %57 = arith.cmpi sge, %53, %56 : vector<16x2xi32>
    %c5_i32_18 = arith.constant 5 : i32
    %58 = vector.broadcast %c5_i32_18 : i32 to vector<16x2xi32>
    %59 = arith.addi %56, %58 : vector<16x2xi32>
    %60 = arith.cmpi slt, %53, %59 : vector<16x2xi32>
    %61 = arith.andi %57, %60 : vector<16x2xi1>
    %62 = arith.extui %61 : vector<16x2xi1> to vector<16x2xi32>
    %63 = arith.sitofp %62 : vector<16x2xi32> to vector<16x2xf32>
    %cst_19 = arith.constant dense<0.000000e+00> : vector<16x128xf32>
    %64 = tpu.matmul %63, %52, %cst_19 {dimension_numbers = #tpu.dot_dimension_numbers<[1], [0], [0], [1], [0, 0, 1, 1], [], []>} : vector<16x2xf32>, vector<2x128xf32>, vector<16x128xf32> -> vector<16x128xf32>
    %c24 = arith.constant 24 : index
    %c0_20 = arith.constant 0 : index
    %65 = vector.load %arg0[%c24, %c0_20] : memref<56x128xf32, #tpu.memory_space<vmem>>, vector<16x128xf32>
    %66 = arith.truncf %65 : vector<16x128xf32> to vector<16x128xbf16>
    %c512 = arith.constant 512 : index
    %c0_21 = arith.constant 0 : index
    %67 = vector.load %arg1[%c512, %c0_21] : memref<896x128xbf16, #tpu.memory_space<vmem>>, vector<128x128xbf16>
    %cst_22 = arith.constant dense<0.000000e+00> : vector<16x128xf32>
    %68 = tpu.matmul %66, %67, %cst_22 {dimension_numbers = #tpu.dot_dimension_numbers<[1], [0], [0], [1], [0, 0, 1, 1], [], []>} : vector<16x128xbf16>, vector<128x128xbf16>, vector<16x128xf32> -> vector<16x128xf32>
    %69 = arith.addf %68, %64 : vector<16x128xf32>
    %70 = math.tanh %69 : vector<16x128xf32>
    %71 = arith.truncf %70 : vector<16x128xf32> to vector<16x128xbf16>
    %c640 = arith.constant 640 : index
    %c0_23 = arith.constant 0 : index
    %72 = vector.load %arg1[%c640, %c0_23] : memref<896x128xbf16, #tpu.memory_space<vmem>>, vector<128x128xbf16>
    %cst_24 = arith.constant dense<0.000000e+00> : vector<16x128xf32>
    %73 = tpu.matmul %71, %72, %cst_24 {dimension_numbers = #tpu.dot_dimension_numbers<[1], [0], [0], [1], [0, 0, 1, 1], [], []>} : vector<16x128xbf16>, vector<128x128xbf16>, vector<16x128xf32> -> vector<16x128xf32>
    %c4 = arith.constant 4 : index
    %c0_25 = arith.constant 0 : index
    %74 = vector.load %arg2[%c4, %c0_25] : memref<8x128xf32, #tpu.memory_space<vmem>>, vector<1x128xf32>
    %75 = vector.broadcast %74 : vector<1x128xf32> to vector<16x128xf32>
    %76 = arith.addf %73, %75 : vector<16x128xf32>
    %77 = math.tanh %76 : vector<16x128xf32>
    %78 = arith.truncf %77 : vector<16x128xf32> to vector<16x128xbf16>
    %c768 = arith.constant 768 : index
    %c0_26 = arith.constant 0 : index
    %79 = vector.load %arg1[%c768, %c0_26] : memref<896x128xbf16, #tpu.memory_space<vmem>>, vector<128x128xbf16>
    %cst_27 = arith.constant dense<0.000000e+00> : vector<16x128xf32>
    %80 = tpu.matmul %78, %79, %cst_27 {dimension_numbers = #tpu.dot_dimension_numbers<[1], [0], [0], [1], [0, 0, 1, 1], [], []>} : vector<16x128xbf16>, vector<128x128xbf16>, vector<16x128xf32> -> vector<16x128xf32>
    %c5 = arith.constant 5 : index
    %c0_28 = arith.constant 0 : index
    %81 = vector.load %arg2[%c5, %c0_28] : memref<8x128xf32, #tpu.memory_space<vmem>>, vector<1x128xf32>
    %82 = vector.broadcast %81 : vector<1x128xf32> to vector<16x128xf32>
    %83 = arith.addf %80, %82 : vector<16x128xf32>
    %c40 = arith.constant 40 : index
    %c0_29 = arith.constant 0 : index
    %84 = vector.load %arg0[%c40, %c0_29] : memref<56x128xf32, #tpu.memory_space<vmem>>, vector<16x3xf32>
    %cst_30 = arith.constant 0.000000e+00 : f32
    %85 = vector.broadcast %cst_30 : f32 to vector<16x128xf32>
    %86 = arith.maximumf %83, %85 : vector<16x128xf32>
    %87 = math.absf %83 : vector<16x128xf32>
    %cst_31 = arith.constant 0.000000e+00 : f32
    %88 = vector.broadcast %cst_31 : f32 to vector<16x128xf32>
    %89 = arith.subf %88, %87 : vector<16x128xf32>
    %90 = math.exp %89 : vector<16x128xf32>
    %91 = math.log1p %90 : vector<16x128xf32>
    %92 = arith.addf %86, %91 : vector<16x128xf32>
    %93 = vector.extract_strided_slice %83 {offsets = [0, 0], sizes = [16, 3], strides = [1, 1]} : vector<16x128xf32> to vector<16x3xf32>
    %94 = vector.extract_strided_slice %92 {offsets = [0, 3], sizes = [16, 3], strides = [1, 1]} : vector<16x128xf32> to vector<16x3xf32>
    %cst_32 = arith.constant 1.000000e+00 : f32
    %95 = vector.broadcast %cst_32 : f32 to vector<16x3xf32>
    %96 = arith.divf %95, %94 : vector<16x3xf32>
    %97 = arith.subf %84, %93 : vector<16x3xf32>
    %98 = arith.mulf %97, %96 : vector<16x3xf32>
    %99 = arith.mulf %98, %98 : vector<16x3xf32>
    %cst_33 = arith.constant -5.000000e-01 : f32
    %100 = vector.broadcast %cst_33 : f32 to vector<16x3xf32>
    %101 = arith.mulf %100, %99 : vector<16x3xf32>
    %102 = math.log %96 : vector<16x3xf32>
    %103 = arith.addf %101, %102 : vector<16x3xf32>
    %cst_34 = arith.constant 0.918938517 : f32
    %104 = vector.broadcast %cst_34 : f32 to vector<16x3xf32>
    %105 = arith.subf %103, %104 : vector<16x3xf32>
    %cst_35 = arith.constant dense<0.000000e+00> : vector<16xf32>
    %106 = vector.multi_reduction <add>, %105, %cst_35 [1] : vector<16x3xf32> to vector<16xf32>
    %107 = vector.shape_cast %106 : vector<16xf32> to vector<16x1xf32>
    %108 = tpu.iota {dimensions = array<i32: 1>} : vector<16x128xi32>
    %c3_i32 = arith.constant 3 : i32
    %109 = vector.broadcast %c3_i32 : i32 to vector<16x128xi32>
    %110 = arith.cmpi slt, %108, %109 : vector<16x128xi32>
    %c6_i32 = arith.constant 6 : i32
    %111 = vector.broadcast %c6_i32 : i32 to vector<16x128xi32>
    %112 = arith.cmpi slt, %108, %111 : vector<16x128xi32>
    %c6_i32_36 = arith.constant 6 : i32
    %113 = vector.broadcast %c6_i32_36 : i32 to vector<16x128xi32>
    %114 = arith.cmpi eq, %108, %113 : vector<16x128xi32>
    %cst_37 = arith.constant 0.000000e+00 : f32
    %115 = vector.shape_cast %107 : vector<16x1xf32> to vector<16x1xf32>
    %116 = vector.broadcast %115 : vector<16x1xf32> to vector<16x128xf32>
    %117 = vector.broadcast %cst_37 : f32 to vector<16x128xf32>
    %118 = arith.select %114, %116, %117 : vector<16x128xi1>, vector<16x128xf32>
    %119 = arith.select %112, %92, %118 : vector<16x128xi1>, vector<16x128xf32>
    %120 = arith.select %110, %83, %119 : vector<16x128xi1>, vector<16x128xf32>
    %c0_38 = arith.constant 0 : index
    %c0_39 = arith.constant 0 : index
    %121 = vector.load %arg3[%c0_38, %c0_39] : memref<16x128xf32, #tpu.memory_space<vmem>>, vector<16x128xf32>
    tpu.vector_store %arg3[%c0_38, %c0_39], %120 {strides = array<i32>} : memref<16x128xf32, #tpu.memory_space<vmem>>, vector<16x128xf32>,
    return
  }
}

</mosaic_0001>

<llo_original>
// kernel: cnp_actor_forward.1
$region0: #{cnp_actor_forward.1}
  #allocation0 [shape = 'u32[]', space=smem, size = 0x4, offset = 0x4, fixed_abs, tag = 'smem constant byte address 0x4 - core index']
  #allocation1 [shape = 'u32[144,128]{1,0:T(1,128)}', space=vmem, size = 0x12000, scoped, tag = 'internal scratch']
  %s0 = inlined_call_operand.vmem [shape: f32[56,128], index: 0, kind: input, shape index: {}]
  %s1 = inlined_call_operand.vmem [shape: bf16[896,128], index: 1, kind: input, shape index: {}]
  %s2 = inlined_call_operand.vmem [shape: f32[8,128], index: 2, kind: input, shape index: {}]
  %s3 = inlined_call_operand.vmem [shape: f32[16,128], index: 3, kind: output, shape index: {}]
  %s4 = sld [smem:[#allocation0]]
  $region22: #{cnp_actor_forward.1} parent=0
    _
  %s6 = ssub.s32 1, %s4
  %s7 = scalar_select 0, %s6, %s4
  // Predicated region
  $region2: #{cnp_actor_forward.1} parent=0 // pred_check
    _
  $region3: #{cnp_actor_forward.1} parent=0 // pred_check_branch
    %9 = sbr.rel (0) target = $region5
  $region4: #{cnp_actor_forward.1} parent=0 // pred_region
    _
  $region5: #{cnp_actor_forward.1} parent=0 // pred_fallthru
    _
  // Predicated region
  $region6: #{cnp_actor_forward.1} parent=0 // pred_check
    _
  $region7: #{cnp_actor_forward.1} parent=0 // pred_check_branch
    %11 = sbr.rel (0) target = $region9
  $region8: #{cnp_actor_forward.1} parent=0 // pred_region
    _
  $region9: #{cnp_actor_forward.1} parent=0 // pred_fallthru
    _
  // Predicated region
  $region10: #{cnp_actor_forward.1} parent=0 // pred_check
    _
  $region11: #{cnp_actor_forward.1} parent=0 // pred_check_branch
    %13 = sbr.rel (0) target = $region13
  $region12: #{cnp_actor_forward.1} parent=0 // pred_region
    _
  $region13: #{cnp_actor_forward.1} parent=0 // pred_fallthru
    _
  %v15 = vld [vmem:[%s0] sm:$0xff]
  %v16 = vld [vmem:[%s0 + $0x8] sm:$0xff]
  %v17 = vld [vmem:[%s0 + $0x10] sm:$0xff]
  %v18 = vpack.c.bf16 %v16, %v15
  %v19 = vpack.c.bf16 %v17, %v17
  %v20 = vld [vmem:[%s1] sm:$0xf]
  %v21 = vld [vmem:[%s1 + $0x4] sm:$0xf]
  %v22 = vld [vmem:[%s1 + $0x8] sm:$0xf]
  %v23 = vld [vmem:[%s1 + $0xc] sm:$0xf]
  %v24 = vld [vmem:[%s1 + $0x10] sm:$0xf]
  %v25 = vld [vmem:[%s1 + $0x14] sm:$0xf]
  %v26 = vld [vmem:[%s1 + $0x18] sm:$0xf]
  %v27 = vld [vmem:[%s1 + $0x1c] sm:$0xf]
  %v28 = vld [vmem:[%s1 + $0x20] sm:$0xf]
  %v29 = vld [vmem:[%s1 + $0x24] sm:$0xf]
  %v30 = vld [vmem:[%s1 + $0x28] sm:$0xf]
  %v31 = vld [vmem:[%s1 + $0x2c] sm:$0xf]
  %v32 = vld [vmem:[%s1 + $0x30] sm:$0xf]
  %v33 = vld [vmem:[%s1 + $0x34] sm:$0xf]
  %v34 = vld [vmem:[%s1 + $0x38] sm:$0xf]
  %v35 = vld [vmem:[%s1 + $0x3c] sm:$0xf]
  %v36 = vld [vmem:[%s2] sm:$0x1]
  %v37 = vlaneseq
  %v38 = vshrl.u32 %v37, 7
  %v39 = vsub.s32 0, %v38
  %v40 = vrot.slane %v36, %v39
  %v57 = vunpack.c.l.b16 %v20
  %v58 = vunpack.c.l.b16 %v21
  %v59 = vunpack.c.l.b16 %v22
  %v60 = vunpack.c.l.b16 %v23
  %v61 = vunpack.c.l.b16 %v24
  %v62 = vunpack.c.l.b16 %v25
  %v63 = vunpack.c.l.b16 %v26
  %v64 = vunpack.c.l.b16 %v27
  %v65 = vunpack.c.l.b16 %v28
  %v66 = vunpack.c.l.b16 %v29
  %v67 = vunpack.c.l.b16 %v30
  %v68 = vunpack.c.l.b16 %v31
  %v69 = vunpack.c.l.b16 %v32
  %v70 = vunpack.c.l.b16 %v33
  %v71 = vunpack.c.l.b16 %v34
  %v72 = vunpack.c.l.b16 %v35
  %v73 = vpack.c.b16 %v58, %v57
  %v74 = vpack.c.b16 %v60, %v59
  %v75 = vpack.c.b16 %v62, %v61
  %v76 = vpack.c.b16 %v64, %v63
  %v77 = vpack.c.b16 %v66, %v65
  %v78 = vpack.c.b16 %v68, %v67
  %v79 = vpack.c.b16 %v70, %v69
  %v80 = vpack.c.b16 %v72, %v71
  %89 = vmatprep.subr.bf16.mxu0 0
  %90 = vmatpush1.bf16.msra.mxu0 %v80
  %91 = vmatprep.subr.bf16.mxu0 0
  %92 = vmatpush1.bf16.msra.mxu0 %v79
  %93 = vmatprep.subr.bf16.mxu0 0
  %94 = vmatpush1.bf16.msra.mxu0 %v78
  %95 = vmatprep.subr.bf16.mxu0 0
  %96 = vmatpush1.bf16.msra.mxu0 %v77
  %97 = vmatprep.subr.bf16.mxu0 0
  %98 = vmatpush1.bf16.msra.mxu0 %v76
  %99 = vmatprep.subr.bf16.mxu0 0
  %100 = vmatpush1.bf16.msra.mxu0 %v75
  %101 = vmatprep.subr.bf16.mxu0 0
  %102 = vmatpush1.bf16.msra.mxu0 %v74
  %103 = vmatprep.subr.bf16.mxu0 0
  %104 = vmatpush1.bf16.msra.mxu0 %v73
  %105 = vmatprep.subr.bf16.mxu0 0
  %106 = vmatpush2.bf16.msra.mxu0 0
  %107 = vmatprep.subr.bf16.mxu0 0
  %108 = vmatpush2.bf16.msra.mxu0 0
  %109 = vmatprep.subr.bf16.mxu0 0
  %110 = vmatpush2.bf16.msra.mxu0 0
  %111 = vmatprep.subr.bf16.mxu0 0
  %112 = vmatpush2.bf16.msra.mxu0 0
  %113 = vmatprep.subr.bf16.mxu0 0
  %114 = vmatpush2.bf16.msra.mxu0 0
  %115 = vmatprep.subr.bf16.mxu0 0
  %116 = vmatpush2.bf16.msra.mxu0 0
  %117 = vmatprep.subr.bf16.mxu0 0
  %118 = vmatpush2.bf16.msra.mxu0 0
  %119 = vmatprep.subr.bf16.mxu0 0
  %120 = vmatpush2.bf16.msra.mxu0 0
  %121 = vmatprep.mubr.bf16.mxu0 0
  %122 = vmatmul.mubr.bf16.gmra.mxu0 %v18
  %v123 = vpop.f32.mrf.mxu0
  %v124 = vadd.f32 %v40, %v123
  %v125 = vpop.f32.mrf.mxu0
  %v126 = vpop.f32.mrf.mxu0
  %v127 = vadd.f32 %v40, %v126
  %v128 = vpop.f32.mrf.mxu0
  %129 = vmatprep.mubr.bf16.mxu0 0
  %130 = vmatmul.mubr.bf16.gmra.mxu0 %v19
  %v131 = vpop.f32.mrf.mxu0
  %v132 = vadd.f32 %v40, %v131
  %v133 = vpop.f32.mrf.mxu0
  %v134 = vpop.f32.mrf.mxu0
  %v135 = vpop.f32.mrf.mxu0
  %136 = vdwg.mxu0
  %v137 = vtanh.pop %v124
  %v138 = vtanh.pop %v127
  %v139 = vtanh.pop %v132
  %v140 = vpack.c.bf16 %v138, %v137
  %v141 = vpack.c.bf16 %v139, %v139
  %v142 = vld [vmem:[%s1 + $0x40] sm:$0xf]
  %v143 = vld [vmem:[%s1 + $0x44] sm:$0xf]
  %v144 = vld [vmem:[%s1 + $0x48] sm:$0xf]
  %v145 = vld [vmem:[%s1 + $0x4c] sm:$0xf]
  %v146 = vld [vmem:[%s1 + $0x50] sm:$0xf]
  %v147 = vld [vmem:[%s1 + $0x54] sm:$0xf]
  %v148 = vld [vmem:[%s1 + $0x58] sm:$0xf]
  %v149 = vld [vmem:[%s1 + $0x5c] sm:$0xf]
  %v150 = vld [vmem:[%s1 + $0x60] sm:$0xf]
  %v151 = vld [vmem:[%s1 + $0x64] sm:$0xf]
  %v152 = vld [vmem:[%s1 + $0x68] sm:$0xf]
  %v153 = vld [vmem:[%s1 + $0x6c] sm:$0xf]
  %v154 = vld [vmem:[%s1 + $0x70] sm:$0xf]
  %v155 = vld [vmem:[%s1 + $0x74] sm:$0xf]
  %v156 = vld [vmem:[%s1 + $0x78] sm:$0xf]
  %v157 = vld [vmem:[%s1 + $0x7c] sm:$0xf]
  %v158 = vld [vmem:[%s2 + $0x1] sm:$0x1]
  %v159 = vlaneseq
  %v160 = vshrl.u32 %v159, 7
  %v161 = vsub.s32 0, %v160
  %v162 = vrot.slane %v158, %v161
  %v179 = vunpack.c.l.b16 %v142
  %v180 = vunpack.c.l.b16 %v143
  %v181 = vunpack.c.l.b16 %v144
  %v182 = vunpack.c.l.b16 %v145
  %v183 = vunpack.c.l.b16 %v146
  %v184 = vunpack.c.l.b16 %v147
  %v185 = vunpack.c.l.b16 %v148
  %v186 = vunpack.c.l.b16 %v149
  %v187 = vunpack.c.l.b16 %v150
  %v188 = vunpack.c.l.b16 %v151
  %v189 = vunpack.c.l.b16 %v152
  %v190 = vunpack.c.l.b16 %v153
  %v191 = vunpack.c.l.b16 %v154
  %v192 = vunpack.c.l.b16 %v155
  %v193 = vunpack.c.l.b16 %v156
  %v194 = vunpack.c.l.b16 %v157
  %v195 = vpack.c.b16 %v180, %v179
  %v196 = vpack.c.b16 %v182, %v181
  %v197 = vpack.c.b16 %v184, %v183
  %v198 = vpack.c.b16 %v186, %v185
  %v199 = vpack.c.b16 %v188, %v187
  %v200 = vpack.c.b16 %v190, %v189
  %v201 = vpack.c.b16 %v192, %v191
  %v202 = vpack.c.b16 %v194, %v193
  %211 = vmatprep.subr.bf16.mxu0 0
  %212 = vmatpush1.bf16.msra.mxu0 %v202
  %213 = vmatprep.subr.bf16.mxu0 0
  %214 = vmatpush1.bf16.msra.mxu0 %v201
  %215 = vmatprep.subr.bf16.mxu0 0
  %216 = vmatpush1.bf16.msra.mxu0 %v200
  %217 = vmatprep.subr.bf16.mxu0 0
  %218 = vmatpush1.bf16.msra.mxu0 %v199
  %219 = vmatprep.subr.bf16.mxu0 0
  %220 = vmatpush1.bf16.msra.mxu0 %v198
  %221 = vmatprep.subr.bf16.mxu0 0
  %222 = vmatpush1.bf16.msra.mxu0 %v197
  %223 = vmatprep.subr.bf16.mxu0 0
  %224 = vmatpush1.bf16.msra.mxu0 %v196
  %225 = vmatprep.subr.bf16.mxu0 0
  %226 = vmatpush1.bf16.msra.mxu0 %v195
  %227 = vmatprep.subr.bf16.mxu0 0
  %228 = vmatpush2.bf16.msra.mxu0 0
  %229 = vmatprep.subr.bf16.mxu0 0
  %230 = vmatpush2.bf16.msra.mxu0 0
  %231 = vmatprep.subr.bf16.mxu0 0
  %232 = vmatpush2.bf16.msra.mxu0 0
  %233 = vmatprep.subr.bf16.mxu0 0
  %234 = vmatpush2.bf16.msra.mxu0 0
  %235 = vmatprep.subr.bf16.mxu0 0
  %236 = vmatpush2.bf16.msra.mxu0 0
  %237 = vmatprep.subr.bf16.mxu0 0
  %238 = vmatpush2.bf16.msra.mxu0 0
  %239 = vmatprep.subr.bf16.mxu0 0
  %240 = vmatpush2.bf16.msra.mxu0 0
  %241 = vmatprep.subr.bf16.mxu0 0
  %242 = vmatpush2.bf16.msra.mxu0 0
  %243 = vmatprep.mubr.bf16.mxu0 0
  %244 = vmatmul.mubr.bf16.gmra.mxu0 %v140
  %v245 = vpop.f32.mrf.mxu0
  %v246 = vadd.f32 %v162, %v245
  %v247 = vpop.f32.mrf.mxu0
  %v248 = vpop.f32.mrf.mxu0
  %v249 = vadd.f32 %v162, %v248
  %v250 = vpop.f32.mrf.mxu0
  %251 = vmatprep.mubr.bf16.mxu0 0
  %252 = vmatmul.mubr.bf16.gmra.mxu0 %v141
  %v253 = vpop.f32.mrf.mxu0
  %v254 = vadd.f32 %v162, %v253
  %v255 = vpop.f32.mrf.mxu0
  %v256 = vpop.f32.mrf.mxu0
  %v257 = vpop.f32.mrf.mxu0
  %258 = vdwg.mxu0
  %v259 = vtanh.pop %v246
  %v260 = vtanh.pop %v249
  %v261 = vtanh.pop %v254
  %v262 = vpack.c.bf16 %v260, %v259
  %v263 = vpack.c.bf16 %v261, %v261
  %v264 = vld [vmem:[%s1 + $0x80] sm:$0xf]
  %v265 = vld [vmem:[%s1 + $0x84] sm:$0xf]
  %v266 = vld [vmem:[%s1 + $0x88] sm:$0xf]
  %v267 = vld [vmem:[%s1 + $0x8c] sm:$0xf]
  %v268 = vld [vmem:[%s1 + $0x90] sm:$0xf]
  %v269 = vld [vmem:[%s1 + $0x94] sm:$0xf]
  %v270 = vld [vmem:[%s1 + $0x98] sm:$0xf]
  %v271 = vld [vmem:[%s1 + $0x9c] sm:$0xf]
  %v272 = vld [vmem:[%s1 + $0xa0] sm:$0xf]
  %v273 = vld [vmem:[%s1 + $0xa4] sm:$0xf]
  %v274 = vld [vmem:[%s1 + $0xa8] sm:$0xf]
  %v275 = vld [vmem:[%s1 + $0xac] sm:$0xf]
  %v276 = vld [vmem:[%s1 + $0xb0] sm:$0xf]
  %v277 = vld [vmem:[%s1 + $0xb4] sm:$0xf]
  %v278 = vld [vmem:[%s1 + $0xb8] sm:$0xf]
  %v279 = vld [vmem:[%s1 + $0xbc] sm:$0xf]
  %v280 = vld [vmem:[%s2 + $0x2] sm:$0x1]
  %v281 = vlaneseq
  %v282 = vshrl.u32 %v281, 7
  %v283 = vsub.s32 0, %v282
  %v284 = vrot.slane %v280, %v283
  %v301 = vunpack.c.l.b16 %v264
  %v302 = vunpack.c.l.b16 %v265
  %v303 = vunpack.c.l.b16 %v266
  %v304 = vunpack.c.l.b16 %v267
  %v305 = vunpack.c.l.b16 %v268
  %v306 = vunpack.c.l.b16 %v269
  %v307 = vunpack.c.l.b16 %v270
  %v308 = vunpack.c.l.b16 %v271
  %v309 = vunpack.c.l.b16 %v272
  %v310 = vunpack.c.l.b16 %v273
  %v311 = vunpack.c.l.b16 %v274
  %v312 = vunpack.c.l.b16 %v275
  %v313 = vunpack.c.l.b16 %v276
  %v314 = vunpack.c.l.b16 %v277
  %v315 = vunpack.c.l.b16 %v278
  %v316 = vunpack.c.l.b16 %v279
  %v317 = vpack.c.b16 %v302, %v301
  %v318 = vpack.c.b16 %v304, %v303
  %v319 = vpack.c.b16 %v306, %v305
  %v320 = vpack.c.b16 %v308, %v307
  %v321 = vpack.c.b16 %v310, %v309
  %v322 = vpack.c.b16 %v312, %v311
  %v323 = vpack.c.b16 %v314, %v313
  %v324 = vpack.c.b16 %v316, %v315
  %333 = vmatprep.subr.bf16.mxu0 0
  %334 = vmatpush1.bf16.msra.mxu0 %v324
  %335 = vmatprep.subr.bf16.mxu0 0
  %336 = vmatpush1.bf16.msra.mxu0 %v323
  %337 = vmatprep.subr.bf16.mxu0 0
  %338 = vmatpush1.bf16.msra.mxu0 %v322
  %339 = vmatprep.subr.bf16.mxu0 0
  %340 = vmatpush1.bf16.msra.mxu0 %v321
  %341 = vmatprep.subr.bf16.mxu0 0
  %342 = vmatpush1.bf16.msra.mxu0 %v320
  %343 = vmatprep.subr.bf16.mxu0 0
  %344 = vmatpush1.bf16.msra.mxu0 %v319
  %345 = vmatprep.subr.bf16.mxu0 0
  %346 = vmatpush1.bf16.msra.mxu0 %v318
  %347 = vmatprep.subr.bf16.mxu0 0
  %348 = vmatpush1.bf16.msra.mxu0 %v317
  %349 = vmatprep.subr.bf16.mxu0 0
  %350 = vmatpush2.bf16.msra.mxu0 0
  %351 = vmatprep.subr.bf16.mxu0 0
  %352 = vmatpush2.bf16.msra.mxu0 0
  %353 = vmatprep.subr.bf16.mxu0 0
  %354 = vmatpush2.bf16.msra.mxu0 0
  %355 = vmatprep.subr.bf16.mxu0 0
  %356 = vmatpush2.bf16.msra.mxu0 0
  %357 = vmatprep.subr.bf16.mxu0 0
  %358 = vmatpush2.bf16.msra.mxu0 0
  %359 = vmatprep.subr.bf16.mxu0 0
  %360 = vmatpush2.bf16.msra.mxu0 0
  %361 = vmatprep.subr.bf16.mxu0 0
  %362 = vmatpush2.bf16.msra.mxu0 0
  %363 = vmatprep.subr.bf16.mxu0 0
  %364 = vmatpush2.bf16.msra.mxu0 0
  %365 = vmatprep.mubr.bf16.mxu0 0
  %366 = vmatmul.mubr.bf16.gmra.mxu0 %v262
  %v367 = vpop.f32.mrf.mxu0
  %v368 = vadd.f32 %v284, %v367
  %v369 = vpop.f32.mrf.mxu0
  %v370 = vpop.f32.mrf.mxu0
  %v371 = vadd.f32 %v284, %v370
  %v372 = vpop.f32.mrf.mxu0
  %373 = vmatprep.mubr.bf16.mxu0 0
  %374 = vmatmul.mubr.bf16.gmra.mxu0 %v263
  %v375 = vpop.f32.mrf.mxu0
  %v376 = vadd.f32 %v284, %v375
  %v377 = vpop.f32.mrf.mxu0
  %v378 = vpop.f32.mrf.mxu0
  %v379 = vpop.f32.mrf.mxu0
  %380 = vdwg.mxu0
  %v381 = vlaneseq
  %v382 = vand.u32 %v381, 127
  %vm383 = vcmp.eq.s32.totalorder %v382, 16
  %v384 = vsel %vm383, 1.0, %v368
  %v385 = vsel %vm383, 1.0, %v371
  %v386 = vsel %vm383, 1.0, %v376
  %388 = vset.pattern.permute.xlu0 127
  %389 = vperm.xlu0 %388, %v15
  %v390 = vpop.permute.xlu0 %389
  %393 = vset.pattern.permute.xlu0 127
  %394 = vperm.xlu0 %393, %v16
  %v395 = vpop.permute.xlu0 %394
  %398 = vset.pattern.permute.xlu0 127
  %399 = vperm.xlu0 %398, %v17
  %v400 = vpop.permute.xlu0 %399
  %v402 = vmul.f32 %v384, %v390
  %v403 = vmul.f32 %v385, %v395
  %v404 = vmul.f32 %v386, %v400
  %v405 = vlaneseq
  %v406 = vshrl.u32 %v405, 7
  %v407 = vmul.u32 %v406, 10
  %vm408 = vcmp.ge.s32.totalorder %v382, %v407
  %v409 = vadd.s32 %v407, 10
  %vm410 = vcmp.lt.s32.totalorder %v382, %v409
  %vm411 = vmand %vm408, %vm410
  %v412 = vsel %vm411, 1, 0
  %v413 = vcvt.s32.f32 %v412
  %vm414 = vcmask 195584
  %v416 = vsel %vm414, %v413, 0
  %418 = vmatprep.subr.mxu0 0.0
  %419 = vmatpush1.msra.mxu0 0.0
  %420 = vmatprep.subr.mxu0 0.0
  %421 = vmatpush1.msra.mxu0 0.0
  %422 = vmatprep.subr.mxu0 0.0
  %423 = vmatpush1.msra.mxu0 0.0
  %424 = vmatprep.subr.mxu0 0.0
  %425 = vmatpush1.msra.mxu0 0.0
  %426 = vmatprep.subr.mxu0 0.0
  %427 = vmatpush1.msra.mxu0 0.0
  %428 = vmatprep.subr.mxu0 0.0
  %429 = vmatpush1.msra.mxu0 0.0
  %430 = vmatprep.subr.mxu0 0.0
  %431 = vmatpush1.msra.mxu0 0.0
  %432 = vmatprep.subr.mxu0 0.0
  %433 = vmatpush1.msra.mxu0 0.0
  %434 = vmatprep.subr.mxu0 0.0
  %435 = vmatpush1.msra.mxu0 0.0
  %436 = vmatprep.subr.mxu0 0.0
  %437 = vmatpush1.msra.mxu0 0.0
  %438 = vmatprep.subr.mxu0 0.0
  %439 = vmatpush1.msra.mxu0 0.0
  %440 = vmatprep.subr.mxu0 0.0
  %441 = vmatpush1.msra.mxu0 0.0
  %442 = vmatprep.subr.mxu0 0.0
  %443 = vmatpush1.msra.mxu0 0.0
  %444 = vmatprep.subr.mxu0 0.0
  %445 = vmatpush1.msra.mxu0 %v404
  %446 = vmatprep.subr.mxu0 0.0
  %447 = vmatpush1.msra.mxu0 %v403
  %448 = vmatprep.subr.mxu0 0.0
  %449 = vmatpush1.msra.mxu0 %v402
  %450 = vmatprep.subr.mxu0 0.0
  %451 = vmatpush2.msra.mxu0 0.0
  %452 = vmatprep.subr.mxu0 0.0
  %453 = vmatpush2.msra.mxu0 0.0
  %454 = vmatprep.subr.mxu0 0.0
  %455 = vmatpush2.msra.mxu0 0.0
  %456 = vmatprep.subr.mxu0 0.0
  %457 = vmatpush2.msra.mxu0 0.0
  %458 = vmatprep.subr.mxu0 0.0
  %459 = vmatpush2.msra.mxu0 0.0
  %460 = vmatprep.subr.mxu0 0.0
  %461 = vmatpush2.msra.mxu0 0.0
  %462 = vmatprep.subr.mxu0 0.0
  %463 = vmatpush2.msra.mxu0 0.0
  %464 = vmatprep.subr.mxu0 0.0
  %465 = vmatpush2.msra.mxu0 0.0
  %466 = vmatprep.subr.mxu0 0.0
  %467 = vmatpush2.msra.mxu0 0.0
  %468 = vmatprep.subr.mxu0 0.0
  %469 = vmatpush2.msra.mxu0 0.0
  %470 = vmatprep.subr.mxu0 0.0
  %471 = vmatpush2.msra.mxu0 0.0
  %472 = vmatprep.subr.mxu0 0.0
  %473 = vmatpush2.msra.mxu0 0.0
  %474 = vmatprep.subr.mxu0 0.0
  %475 = vmatpush2.msra.mxu0 0.0
  %476 = vmatprep.subr.mxu0 0.0
  %477 = vmatpush2.msra.mxu0 0.0
  %478 = vmatprep.subr.mxu0 0.0
  %479 = vmatpush2.msra.mxu0 0.0
  %480 = vmatprep.subr.mxu0 0.0
  %481 = vmatpush2.msra.mxu0 0.0
  %482 = vmatprep.mubr.f32.mxu0 0.0
  %483 = vmatmul.mubr.f32.gmra.mxu0 %v416
  %v484 = vpop.f32.mrf.mxu0
  %v485 = vadd.f32 0.0, %v484
  %v486 = vpop.f32.mrf.mxu0
  %487 = vdwg.mxu0
  %v488 = vmax.f32 %v485, 1e-06
  %v489 = vrcp.pop %v488
  %491 = vset.pattern.permute.xlu0 16
  %492 = vperm.xlu0 %491, %v489
  %v493 = vpop.permute.xlu0 %492
  %v495 = vmul.f32 %v485, %v493
  %v496 = vpack.c.bf16 %v495, %v495
  %v497 = vld [vmem:[%s1 + $0xc0] sm:$0xf]
  %v498 = vld [vmem:[%s1 + $0xc4] sm:$0xf]
  %v499 = vld [vmem:[%s1 + $0xc8] sm:$0xf]
  %v500 = vld [vmem:[%s1 + $0xcc] sm:$0xf]
  %v501 = vld [vmem:[%s1 + $0xd0] sm:$0xf]
  %v502 = vld [vmem:[%s1 + $0xd4] sm:$0xf]
  %v503 = vld [vmem:[%s1 + $0xd8] sm:$0xf]
  %v504 = vld [vmem:[%s1 + $0xdc] sm:$0xf]
  %v505 = vld [vmem:[%s1 + $0xe0] sm:$0xf]
  %v506 = vld [vmem:[%s1 + $0xe4] sm:$0xf]
  %v507 = vld [vmem:[%s1 + $0xe8] sm:$0xf]
  %v508 = vld [vmem:[%s1 + $0xec] sm:$0xf]
  %v509 = vld [vmem:[%s1 + $0xf0] sm:$0xf]
  %v510 = vld [vmem:[%s1 + $0xf4] sm:$0xf]
  %v511 = vld [vmem:[%s1 + $0xf8] sm:$0xf]
  %v512 = vld [vmem:[%s1 + $0xfc] sm:$0xf]
  %v513 = vld [vmem:[%s2 + $0x3] sm:$0x1]
  %v514 = vlaneseq
  %v515 = vshrl.u32 %v514, 7
  %v516 = vsub.s32 0, %v515
  %v517 = vrot.slane %v513, %v516
  %v534 = vunpack.c.l.b16 %v497
  %v535 = vunpack.c.l.b16 %v498
  %v536 = vunpack.c.l.b16 %v499
  %v537 = vunpack.c.l.b16 %v500
  %v538 = vunpack.c.l.b16 %v501
  %v539 = vunpack.c.l.b16 %v502
  %v540 = vunpack.c.l.b16 %v503
  %v541 = vunpack.c.l.b16 %v504
  %v542 = vunpack.c.l.b16 %v505
  %v543 = vunpack.c.l.b16 %v506
  %v544 = vunpack.c.l.b16 %v507
  %v545 = vunpack.c.l.b16 %v508
  %v546 = vunpack.c.l.b16 %v509
  %v547 = vunpack.c.l.b16 %v510
  %v548 = vunpack.c.l.b16 %v511
  %v549 = vunpack.c.l.b16 %v512
  %v550 = vpack.c.b16 %v535, %v534
  %v551 = vpack.c.b16 %v537, %v536
  %v552 = vpack.c.b16 %v539, %v538
  %v553 = vpack.c.b16 %v541, %v540
  %v554 = vpack.c.b16 %v543, %v542
  %v555 = vpack.c.b16 %v545, %v544
  %v556 = vpack.c.b16 %v547, %v546
  %v557 = vpack.c.b16 %v549, %v548
  %566 = vmatprep.subr.bf16.mxu0 0
  %567 = vmatpush1.bf16.msra.mxu0 %v557
  %568 = vmatprep.subr.bf16.mxu0 0
  %569 = vmatpush1.bf16.msra.mxu0 %v556
  %570 = vmatprep.subr.bf16.mxu0 0
  %571 = vmatpush1.bf16.msra.mxu0 %v555
  %572 = vmatprep.subr.bf16.mxu0 0
  %573 = vmatpush1.bf16.msra.mxu0 %v554
  %574 = vmatprep.subr.bf16.mxu0 0
  %575 = vmatpush1.bf16.msra.mxu0 %v553
  %576 = vmatprep.subr.bf16.mxu0 0
  %577 = vmatpush1.bf16.msra.mxu0 %v552
  %578 = vmatprep.subr.bf16.mxu0 0
  %579 = vmatpush1.bf16.msra.mxu0 %v551
  %580 = vmatprep.subr.bf16.mxu0 0
  %581 = vmatpush1.bf16.msra.mxu0 %v550
  %582 = vmatprep.subr.bf16.mxu0 0
  %583 = vmatpush2.bf16.msra.mxu0 0
  %584 = vmatprep.subr.bf16.mxu0 0
  %585 = vmatpush2.bf16.msra.mxu0 0
  %586 = vmatprep.subr.bf16.mxu0 0
  %587 = vmatpush2.bf16.msra.mxu0 0
  %588 = vmatprep.subr.bf16.mxu0 0
  %589 = vmatpush2.bf16.msra.mxu0 0
  %590 = vmatprep.subr.bf16.mxu0 0
  %591 = vmatpush2.bf16.msra.mxu0 0
  %592 = vmatprep.subr.bf16.mxu0 0
  %593 = vmatpush2.bf16.msra.mxu0 0
  %594 = vmatprep.subr.bf16.mxu0 0
  %595 = vmatpush2.bf16.msra.mxu0 0
  %596 = vmatprep.subr.bf16.mxu0 0
  %597 = vmatpush2.bf16.msra.mxu0 0
  %598 = vmatprep.mubr.bf16.mxu0 0
  %599 = vmatmul.mubr.bf16.gmra.mxu0 %v496
  %v600 = vpop.f32.mrf.mxu0
  %v601 = vadd.f32 %v517, %v600
  %v602 = vpop.f32.mrf.mxu0
  %v603 = vpop.f32.mrf.mxu0
  %v604 = vpop.f32.mrf.mxu0
  %605 = vdwg.mxu0
  %v606 = vadd.s32 %v406, 8
  %v607 = vmul.u32 %v382, 5
  %vm608 = vcmp.ge.s32.totalorder %v406, %v607
  %vm609 = vcmp.ge.s32.totalorder %v606, %v607
  %v610 = vadd.s32 %v607, 5
  %vm611 = vcmp.lt.s32.totalorder %v406, %v610
  %vm612 = vcmp.lt.s32.totalorder %v606, %v610
  %vm613 = vmand %vm608, %vm611
  %vm614 = vmand %vm609, %vm612
  %v615 = vsel %vm613, 1, 0
  %v616 = vsel %vm614, 1, 0
  %v617 = vcvt.s32.f32 %v615
  %v618 = vcvt.s32.f32 %v616
  %vm619 = vcmask 15360
  %v621 = vsel %vm619, %v617, 0
  %v624 = vsel %vm619, %v618, 0
  %vm626 = vcmask 1041408
  %v628 = vsel %vm626, %v601, 0
  %630 = vmatprep.subr.mxu0 0.0
  %631 = vmatpush1.msra.mxu0 0.0
  %632 = vmatprep.subr.mxu0 0.0
  %633 = vmatpush1.msra.mxu0 0.0
  %634 = vmatprep.subr.mxu0 0.0
  %635 = vmatpush1.msra.mxu0 0.0
  %636 = vmatprep.subr.mxu0 0.0
  %637 = vmatpush1.msra.mxu0 0.0
  %638 = vmatprep.subr.mxu0 0.0
  %639 = vmatpush1.msra.mxu0 0.0
  %640 = vmatprep.subr.mxu0 0.0
  %641 = vmatpush1.msra.mxu0 0.0
  %642 = vmatprep.subr.mxu0 0.0
  %643 = vmatpush1.msra.mxu0 0.0
  %644 = vmatprep.subr.mxu0 0.0
  %645 = vmatpush1.msra.mxu0 0.0
  %646 = vmatprep.subr.mxu0 0.0
  %647 = vmatpush1.msra.mxu0 0.0
  %648 = vmatprep.subr.mxu0 0.0
  %649 = vmatpush1.msra.mxu0 0.0
  %650 = vmatprep.subr.mxu0 0.0
  %651 = vmatpush1.msra.mxu0 0.0
  %652 = vmatprep.subr.mxu0 0.0
  %653 = vmatpush1.msra.mxu0 0.0
  %654 = vmatprep.subr.mxu0 0.0
  %655 = vmatpush1.msra.mxu0 0.0
  %656 = vmatprep.subr.mxu0 0.0
  %657 = vmatpush1.msra.mxu0 0.0
  %658 = vmatprep.subr.mxu0 0.0
  %659 = vmatpush1.msra.mxu0 0.0
  %660 = vmatprep.subr.mxu0 0.0
  %661 = vmatpush1.msra.mxu0 %v628
  %662 = vmatprep.subr.mxu0 0.0
  %663 = vmatpush2.msra.mxu0 0.0
  %664 = vmatprep.subr.mxu0 0.0
  %665 = vmatpush2.msra.mxu0 0.0
  %666 = vmatprep.subr.mxu0 0.0
  %667 = vmatpush2.msra.mxu0 0.0
  %668 = vmatprep.subr.mxu0 0.0
  %669 = vmatpush2.msra.mxu0 0.0
  %670 = vmatprep.subr.mxu0 0.0
  %671 = vmatpush2.msra.mxu0 0.0
  %672 = vmatprep.subr.mxu0 0.0
  %673 = vmatpush2.msra.mxu0 0.0
  %674 = vmatprep.subr.mxu0 0.0
  %675 = vmatpush2.msra.mxu0 0.0
  %676 = vmatprep.subr.mxu0 0.0
  %677 = vmatpush2.msra.mxu0 0.0
  %678 = vmatprep.subr.mxu0 0.0
  %679 = vmatpush2.msra.mxu0 0.0
  %680 = vmatprep.subr.mxu0 0.0
  %681 = vmatpush2.msra.mxu0 0.0
  %682 = vmatprep.subr.mxu0 0.0
  %683 = vmatpush2.msra.mxu0 0.0
  %684 = vmatprep.subr.mxu0 0.0
  %685 = vmatpush2.msra.mxu0 0.0
  %686 = vmatprep.subr.mxu0 0.0
  %687 = vmatpush2.msra.mxu0 0.0
  %688 = vmatprep.subr.mxu0 0.0
  %689 = vmatpush2.msra.mxu0 0.0
  %690 = vmatprep.subr.mxu0 0.0
  %691 = vmatpush2.msra.mxu0 0.0
  %692 = vmatprep.subr.mxu0 0.0
  %693 = vmatpush2.msra.mxu0 0.0
  %694 = vmatprep.mubr.f32.mxu0 0.0
  %695 = vmatmul.mubr.f32.gmra.mxu0 %v621
  %v696 = vpop.f32.mrf.mxu0
  %v697 = vadd.f32 0.0, %v696
  %v698 = vpop.f32.mrf.mxu0
  %699 = vmatprep.mubr.f32.mxu0 0.0
  %700 = vmatmul.mubr.f32.gmra.mxu0 %v624
  %v701 = vpop.f32.mrf.mxu0
  %v702 = vadd.f32 0.0, %v701
  %v703 = vpop.f32.mrf.mxu0
  %704 = vdwg.mxu0
  %v705 = vld [vmem:[%s0 + $0x18] sm:$0xff]
  %v706 = vld [vmem:[%s0 + $0x20] sm:$0xff]
  %v707 = vpack.c.bf16 %v706, %v705
  %v708 = vld [vmem:[%s1 + $0x100] sm:$0xf]
  %v709 = vld [vmem:[%s1 + $0x104] sm:$0xf]
  %v710 = vld [vmem:[%s1 + $0x108] sm:$0xf]
  %v711 = vld [vmem:[%s1 + $0x10c] sm:$0xf]
  %v712 = vld [vmem:[%s1 + $0x110] sm:$0xf]
  %v713 = vld [vmem:[%s1 + $0x114] sm:$0xf]
  %v714 = vld [vmem:[%s1 + $0x118] sm:$0xf]
  %v715 = vld [vmem:[%s1 + $0x11c] sm:$0xf]
  %v716 = vld [vmem:[%s1 + $0x120] sm:$0xf]
  %v717 = vld [vmem:[%s1 + $0x124] sm:$0xf]
  %v718 = vld [vmem:[%s1 + $0x128] sm:$0xf]
  %v719 = vld [vmem:[%s1 + $0x12c] sm:$0xf]
  %v720 = vld [vmem:[%s1 + $0x130] sm:$0xf]
  %v721 = vld [vmem:[%s1 + $0x134] sm:$0xf]
  %v722 = vld [vmem:[%s1 + $0x138] sm:$0xf]
  %v723 = vld [vmem:[%s1 + $0x13c] sm:$0xf]
  %v740 = vunpack.c.l.b16 %v708
  %v741 = vunpack.c.l.b16 %v709
  %v742 = vunpack.c.l.b16 %v710
  %v743 = vunpack.c.l.b16 %v711
  %v744 = vunpack.c.l.b16 %v712
  %v745 = vunpack.c.l.b16 %v713
  %v746 = vunpack.c.l.b16 %v714
  %v747 = vunpack.c.l.b16 %v715
  %v748 = vunpack.c.l.b16 %v716
  %v749 = vunpack.c.l.b16 %v717
  %v750 = vunpack.c.l.b16 %v718
  %v751 = vunpack.c.l.b16 %v719
  %v752 = vunpack.c.l.b16 %v720
  %v753 = vunpack.c.l.b16 %v721
  %v754 = vunpack.c.l.b16 %v722
  %v755 = vunpack.c.l.b16 %v723
  %v756 = vpack.c.b16 %v741, %v740
  %v757 = vpack.c.b16 %v743, %v742
  %v758 = vpack.c.b16 %v745, %v744
  %v759 = vpack.c.b16 %v747, %v746
  %v760 = vpack.c.b16 %v749, %v748
  %v761 = vpack.c.b16 %v751, %v750
  %v762 = vpack.c.b16 %v753, %v752
  %v763 = vpack.c.b16 %v755, %v754
  %772 = vmatprep.subr.bf16.mxu0 0
  %773 = vmatpush1.bf16.msra.mxu0 %v763
  %774 = vmatprep.subr.bf16.mxu0 0
  %775 = vmatpush1.bf16.msra.mxu0 %v762
  %776 = vmatprep.subr.bf16.mxu0 0
  %777 = vmatpush1.bf16.msra.mxu0 %v761
  %778 = vmatprep.subr.bf16.mxu0 0
  %779 = vmatpush1.bf16.msra.mxu0 %v760
  %780 = vmatprep.subr.bf16.mxu0 0
  %781 = vmatpush1.bf16.msra.mxu0 %v759
  %782 = vmatprep.subr.bf16.mxu0 0
  %783 = vmatpush1.bf16.msra.mxu0 %v758
  %784 = vmatprep.subr.bf16.mxu0 0
  %785 = vmatpush1.bf16.msra.mxu0 %v757
  %786 = vmatprep.subr.bf16.mxu0 0
  %787 = vmatpush1.bf16.msra.mxu0 %v756
  %788 = vmatprep.subr.bf16.mxu0 0
  %789 = vmatpush2.bf16.msra.mxu0 0
  %790 = vmatprep.subr.bf16.mxu0 0
  %791 = vmatpush2.bf16.msra.mxu0 0
  %792 = vmatprep.subr.bf16.mxu0 0
  %793 = vmatpush2.bf16.msra.mxu0 0
  %794 = vmatprep.subr.bf16.mxu0 0
  %795 = vmatpush2.bf16.msra.mxu0 0
  %796 = vmatprep.subr.bf16.mxu0 0
  %797 = vmatpush2.bf16.msra.mxu0 0
  %798 = vmatprep.subr.bf16.mxu0 0
  %799 = vmatpush2.bf16.msra.mxu0 0
  %800 = vmatprep.subr.bf16.mxu0 0
  %801 = vmatpush2.bf16.msra.mxu0 0
  %802 = vmatprep.subr.bf16.mxu0 0
  %803 = vmatpush2.bf16.msra.mxu0 0
  %804 = vmatprep.mubr.bf16.mxu0 0
  %805 = vmatmul.mubr.bf16.gmra.mxu0 %v707
  %v806 = vpop.f32.mrf.mxu0
  %v807 = vadd.f32 %v697, %v806
  %v808 = vpop.f32.mrf.mxu0
  %v809 = vpop.f32.mrf.mxu0
  %v810 = vadd.f32 %v702, %v809
  %v811 = vpop.f32.mrf.mxu0
  %812 = vdwg.mxu0
  %v813 = vtanh.pop %v807
  %v814 = vtanh.pop %v810
  %v815 = vpack.c.bf16 %v814, %v813
  %v816 = vld [vmem:[%s1 + $0x140] sm:$0xf]
  %v817 = vld [vmem:[%s1 + $0x144] sm:$0xf]
  %v818 = vld [vmem:[%s1 + $0x148] sm:$0xf]
  %v819 = vld [vmem:[%s1 + $0x14c] sm:$0xf]
  %v820 = vld [vmem:[%s1 + $0x150] sm:$0xf]
  %v821 = vld [vmem:[%s1 + $0x154] sm:$0xf]
  %v822 = vld [vmem:[%s1 + $0x158] sm:$0xf]
  %v823 = vld [vmem:[%s1 + $0x15c] sm:$0xf]
  %v824 = vld [vmem:[%s1 + $0x160] sm:$0xf]
  %v825 = vld [vmem:[%s1 + $0x164] sm:$0xf]
  %v826 = vld [vmem:[%s1 + $0x168] sm:$0xf]
  %v827 = vld [vmem:[%s1 + $0x16c] sm:$0xf]
  %v828 = vld [vmem:[%s1 + $0x170] sm:$0xf]
  %v829 = vld [vmem:[%s1 + $0x174] sm:$0xf]
  %v830 = vld [vmem:[%s1 + $0x178] sm:$0xf]
  %v831 = vld [vmem:[%s1 + $0x17c] sm:$0xf]
  %v832 = vld [vmem:[%s2 + $0x4] sm:$0x1]
  %v833 = vlaneseq
  %v834 = vshrl.u32 %v833, 7
  %v835 = vsub.s32 0, %v834
  %v836 = vrot.slane %v832, %v835
  %v853 = vunpack.c.l.b16 %v816
  %v854 = vunpack.c.l.b16 %v817
  %v855 = vunpack.c.l.b16 %v818
  %v856 = vunpack.c.l.b16 %v819
  %v857 = vunpack.c.l.b16 %v820
  %v858 = vunpack.c.l.b16 %v821
  %v859 = vunpack.c.l.b16 %v822
  %v860 = vunpack.c.l.b16 %v823
  %v861 = vunpack.c.l.b16 %v824
  %v862 = vunpack.c.l.b16 %v825
  %v863 = vunpack.c.l.b16 %v826
  %v864 = vunpack.c.l.b16 %v827
  %v865 = vunpack.c.l.b16 %v828
  %v866 = vunpack.c.l.b16 %v829
  %v867 = vunpack.c.l.b16 %v830
  %v868 = vunpack.c.l.b16 %v831
  %v869 = vpack.c.b16 %v854, %v853
  %v870 = vpack.c.b16 %v856, %v855
  %v871 = vpack.c.b16 %v858, %v857
  %v872 = vpack.c.b16 %v860, %v859
  %v873 = vpack.c.b16 %v862, %v861
  %v874 = vpack.c.b16 %v864, %v863
  %v875 = vpack.c.b16 %v866, %v865
  %v876 = vpack.c.b16 %v868, %v867
  %885 = vmatprep.subr.bf16.mxu0 0
  %886 = vmatpush1.bf16.msra.mxu0 %v876
  %887 = vmatprep.subr.bf16.mxu0 0
  %888 = vmatpush1.bf16.msra.mxu0 %v875
  %889 = vmatprep.subr.bf16.mxu0 0
  %890 = vmatpush1.bf16.msra.mxu0 %v874
  %891 = vmatprep.subr.bf16.mxu0 0
  %892 = vmatpush1.bf16.msra.mxu0 %v873
  %893 = vmatprep.subr.bf16.mxu0 0
  %894 = vmatpush1.bf16.msra.mxu0 %v872
  %895 = vmatprep.subr.bf16.mxu0 0
  %896 = vmatpush1.bf16.msra.mxu0 %v871
  %897 = vmatprep.subr.bf16.mxu0 0
  %898 = vmatpush1.bf16.msra.mxu0 %v870
  %899 = vmatprep.subr.bf16.mxu0 0
  %900 = vmatpush1.bf16.msra.mxu0 %v869
  %901 = vmatprep.subr.bf16.mxu0 0
  %902 = vmatpush2.bf16.msra.mxu0 0
  %903 = vmatprep.subr.bf16.mxu0 0
  %904 = vmatpush2.bf16.msra.mxu0 0
  %905 = vmatprep.subr.bf16.mxu0 0
  %906 = vmatpush2.bf16.msra.mxu0 0
  %907 = vmatprep.subr.bf16.mxu0 0
  %908 = vmatpush2.bf16.msra.mxu0 0
  %909 = vmatprep.subr.bf16.mxu0 0
  %910 = vmatpush2.bf16.msra.mxu0 0
  %911 = vmatprep.subr.bf16.mxu0 0
  %912 = vmatpush2.bf16.msra.mxu0 0
  %913 = vmatprep.subr.bf16.mxu0 0
  %914 = vmatpush2.bf16.msra.mxu0 0
  %915 = vmatprep.subr.bf16.mxu0 0
  %916 = vmatpush2.bf16.msra.mxu0 0
  %917 = vmatprep.mubr.bf16.mxu0 0
  %918 = vmatmul.mubr.bf16.gmra.mxu0 %v815
  %v919 = vpop.f32.mrf.mxu0
  %v920 = vadd.f32 %v836, %v919
  %v921 = vpop.f32.mrf.mxu0
  %v922 = vpop.f32.mrf.mxu0
  %v923 = vadd.f32 %v836, %v922
  %v924 = vpop.f32.mrf.mxu0
  %925 = vdwg.mxu0
  %v926 = vtanh.pop %v920
  %v927 = vtanh.pop %v923
  %v928 = vpack.c.bf16 %v927, %v926
  %v929 = vld [vmem:[%s1 + $0x180] sm:$0xf]
  %v930 = vld [vmem:[%s1 + $0x184] sm:$0xf]
  %v931 = vld [vmem:[%s1 + $0x188] sm:$0xf]
  %v932 = vld [vmem:[%s1 + $0x18c] sm:$0xf]
  %v933 = vld [vmem:[%s1 + $0x190] sm:$0xf]
  %v934 = vld [vmem:[%s1 + $0x194] sm:$0xf]
  %v935 = vld [vmem:[%s1 + $0x198] sm:$0xf]
  %v936 = vld [vmem:[%s1 + $0x19c] sm:$0xf]
  %v937 = vld [vmem:[%s1 + $0x1a0] sm:$0xf]
  %v938 = vld [vmem:[%s1 + $0x1a4] sm:$0xf]
  %v939 = vld [vmem:[%s1 + $0x1a8] sm:$0xf]
  %v940 = vld [vmem:[%s1 + $0x1ac] sm:$0xf]
  %v941 = vld [vmem:[%s1 + $0x1b0] sm:$0xf]
  %v942 = vld [vmem:[%s1 + $0x1b4] sm:$0xf]
  %v943 = vld [vmem:[%s1 + $0x1b8] sm:$0xf]
  %v944 = vld [vmem:[%s1 + $0x1bc] sm:$0xf]
  %v945 = vld [vmem:[%s2 + $0x5] sm:$0x1]
  %v946 = vlaneseq
  %v947 = vshrl.u32 %v946, 7
  %v948 = vsub.s32 0, %v947
  %v949 = vrot.slane %v945, %v948
  %v966 = vunpack.c.l.b16 %v929
  %v967 = vunpack.c.l.b16 %v930
  %v968 = vunpack.c.l.b16 %v931
  %v969 = vunpack.c.l.b16 %v932
  %v970 = vunpack.c.l.b16 %v933
  %v971 = vunpack.c.l.b16 %v934
  %v972 = vunpack.c.l.b16 %v935
  %v973 = vunpack.c.l.b16 %v936
  %v974 = vunpack.c.l.b16 %v937
  %v975 = vunpack.c.l.b16 %v938
  %v976 = vunpack.c.l.b16 %v939
  %v977 = vunpack.c.l.b16 %v940
  %v978 = vunpack.c.l.b16 %v941
  %v979 = vunpack.c.l.b16 %v942
  %v980 = vunpack.c.l.b16 %v943
  %v981 = vunpack.c.l.b16 %v944
  %v982 = vpack.c.b16 %v967, %v966
  %v983 = vpack.c.b16 %v969, %v968
  %v984 = vpack.c.b16 %v971, %v970
  %v985 = vpack.c.b16 %v973, %v972
  %v986 = vpack.c.b16 %v975, %v974
  %v987 = vpack.c.b16 %v977, %v976
  %v988 = vpack.c.b16 %v979, %v978
  %v989 = vpack.c.b16 %v981, %v980
  %998 = vmatprep.subr.bf16.mxu0 0
  %999 = vmatpush1.bf16.msra.mxu0 %v989
  %1000 = vmatprep.subr.bf16.mxu0 0
  %1001 = vmatpush1.bf16.msra.mxu0 %v988
  %1002 = vmatprep.subr.bf16.mxu0 0
  %1003 = vmatpush1.bf16.msra.mxu0 %v987
  %1004 = vmatprep.subr.bf16.mxu0 0
  %1005 = vmatpush1.bf16.msra.mxu0 %v986
  %1006 = vmatprep.subr.bf16.mxu0 0
  %1007 = vmatpush1.bf16.msra.mxu0 %v985
  %1008 = vmatprep.subr.bf16.mxu0 0
  %1009 = vmatpush1.bf16.msra.mxu0 %v984
  %1010 = vmatprep.subr.bf16.mxu0 0
  %1011 = vmatpush1.bf16.msra.mxu0 %v983
  %1012 = vmatprep.subr.bf16.mxu0 0
  %1013 = vmatpush1.bf16.msra.mxu0 %v982
  %1014 = vmatprep.subr.bf16.mxu0 0
  %1015 = vmatpush2.bf16.msra.mxu0 0
  %1016 = vmatprep.subr.bf16.mxu0 0
  %1017 = vmatpush2.bf16.msra.mxu0 0
  %1018 = vmatprep.subr.bf16.mxu0 0
  %1019 = vmatpush2.bf16.msra.mxu0 0
  %1020 = vmatprep.subr.bf16.mxu0 0
  %1021 = vmatpush2.bf16.msra.mxu0 0
  %1022 = vmatprep.subr.bf16.mxu0 0
  %1023 = vmatpush2.bf16.msra.mxu0 0
  %1024 = vmatprep.subr.bf16.mxu0 0
  %1025 = vmatpush2.bf16.msra.mxu0 0
  %1026 = vmatprep.subr.bf16.mxu0 0
  %1027 = vmatpush2.bf16.msra.mxu0 0
  %1028 = vmatprep.subr.bf16.mxu0 0
  %1029 = vmatpush2.bf16.msra.mxu0 0
  %1030 = vmatprep.mubr.bf16.mxu0 0
  %1031 = vmatmul.mubr.bf16.gmra.mxu0 %v928
  %v1032 = vpop.f32.mrf.mxu0
  %v1033 = vadd.f32 %v949, %v1032
  %v1034 = vpop.f32.mrf.mxu0
  %v1035 = vpop.f32.mrf.mxu0
  %v1036 = vadd.f32 %v949, %v1035
  %v1037 = vpop.f32.mrf.mxu0
  %1038 = vdwg.mxu0
  %v1039 = vld [vmem:[%s0 + $0x28] sm:$0xff]
  %v1040 = vld [vmem:[%s0 + $0x30] sm:$0xff]
  %v1041 = vmax.f32 %v1033, 0.0
  %v1042 = vmax.f32 %v1036, 0.0
  %v1043 = vand.u32 2147483647, %v1033
  %v1044 = vand.u32 2147483647, %v1036
  %v1045 = vsub.f32 0.0, %v1043
  %v1046 = vsub.f32 0.0, %v1044
  %v1047 = vmul.f32 %v1045, 1.442695
  %v1048 = vpow.pop %v1047
  %v1049 = vmul.f32 %v1046, 1.442695
  %v1050 = vpow.pop %v1049
  %v1051 = vadd.f32 %v1048, 1.0
  %v1052 = vlog2.pop %v1051
  %v1053 = vmul.f32 %v1052, 0.6931472
  %v1054 = vmul.f32 -0.5, %v1048
  %v1055 = vadd.f32 %v1054, 1.0
  %v1056 = vmul.f32 %v1055, %v1048
  %v1057 = vand.u32 2147483647, %v1048
  %vm1058 = vcmp.lt.f32.partialorder %v1057, 0.0004427343
  %v1059 = vsel %vm1058, %v1056, %v1053
  %v1060 = vadd.f32 %v1050, 1.0
  %v1061 = vlog2.pop %v1060
  %v1062 = vmul.f32 %v1061, 0.6931472
  %v1063 = vmul.f32 -0.5, %v1050
  %v1064 = vadd.f32 %v1063, 1.0
  %v1065 = vmul.f32 %v1064, %v1050
  %v1066 = vand.u32 2147483647, %v1050
  %vm1067 = vcmp.lt.f32.partialorder %v1066, 0.0004427343
  %v1068 = vsel %vm1067, %v1065, %v1062
  %v1069 = vadd.f32 %v1041, %v1059
  %v1070 = vadd.f32 %v1042, %v1068
  %v1071 = vrcp.pop %v1069
  %v1072 = vmul.f32 1.0, %v1071
  %v1073 = vrcp.pop %v1070
  %v1074 = vmul.f32 1.0, %v1073
  %v1075 = vsub.f32 %v1039, %v1033
  %v1076 = vsub.f32 %v1040, %v1036
  %1079 = vrot.lane.b32.xlu0 %v1072, 125
  %v1080 = vpop.permute.xlu0 %1079
  %1081 = vrot.lane.b32.xlu0 %v1074, 125
  %v1082 = vpop.permute.xlu0 %1081
  %v1085 = vmul.f32 %v1075, %v1080
  %v1086 = vmul.f32 %v1076, %v1082
  %v1087 = vmul.f32 %v1085, %v1085
  %v1088 = vmul.f32 %v1086, %v1086
  %v1089 = vmul.f32 %v1087, -0.5
  %v1090 = vmul.f32 %v1088, -0.5
  %v1091 = vlog2.pop %v1072
  %v1092 = vmul.f32 %v1091, 0.6931472
  %v1093 = vlog2.pop %v1074
  %v1094 = vmul.f32 %v1093, 0.6931472
  %1097 = vrot.lane.b32.xlu0 %v1092, 125
  %v1098 = vpop.permute.xlu0 %1097
  %1099 = vrot.lane.b32.xlu0 %v1094, 125
  %v1100 = vpop.permute.xlu0 %1099
  %v1103 = vadd.f32 %v1089, %v1098
  %v1104 = vadd.f32 %v1090, %v1100
  %v1105 = vsub.f32 %v1103, 0.9189385
  %v1106 = vsub.f32 %v1104, 0.9189385
  %vm1107 = vcmask 23552
  %v1108 = vsel %vm1107, %v1105, 0.0
  %1109 = vadd.xlane.f32.xlu0 %v1108
  %v1110 = vpop.xlane.xlu0 %1109
  %v1111 = vsel %vm1107, %v1106, 0.0
  %1112 = vadd.xlane.f32.xlu0 %v1111
  %v1113 = vpop.xlane.xlu0 %1112
  %vm1114 = vcmp.lt.s32.totalorder %v382, 3
  %vm1115 = vcmp.lt.s32.totalorder %v382, 6
  %vm1116 = vcmp.eq.s32.totalorder %v382, 6
  %v1117 = vsel %vm1116, %v1110, 0.0
  %v1118 = vsel %vm1116, %v1113, 0.0
  %v1119 = vsel %vm1115, %v1069, %v1117
  %v1120 = vsel %vm1115, %v1070, %v1118
  %v1121 = vsel %vm1114, %v1033, %v1119
  %v1122 = vsel %vm1114, %v1036, %v1120
  %1123 = vst [vmem:[%s3] sm:$0xff] %v1121
  %1124 = vst [vmem:[%s3 + $0x8] sm:$0xff] %v1122
  // Predicated region
  $region14: #{cnp_actor_forward.1} parent=0 // pred_check
    _
  $region15: #{cnp_actor_forward.1} parent=0 // pred_check_branch
    %1126 = sbr.rel (0) target = $region17
  $region16: #{cnp_actor_forward.1} parent=0 // pred_region
    _
  $region17: #{cnp_actor_forward.1} parent=0 // pred_fallthru
    _
  // Predicated region
  $region18: #{cnp_actor_forward.1} parent=0 // pred_check
    _
  $region19: #{cnp_actor_forward.1} parent=0 // pred_check_branch
    %1128 = sbr.rel (0) target = $region21
  $region20: #{cnp_actor_forward.1} parent=0 // pred_region
    _
  $region21: #{cnp_actor_forward.1} parent=0 // pred_fallthru
    _

</llo_original>
